<compile_context>
chip_gen: v7x
topology: tpu7x:2x2x1
jax: 0.10.0
libtpu: 0.0.40
codegen_flags: <defaults>
</compile_context>

<pallas_src>
import jax
import jax.numpy as jnp
from jax.experimental import pallas as pl
from jax.experimental.pallas import tpu as pltpu


# ----------------------------- small helpers -------------------------------


def _round_up(x, m):
    return (x + m - 1) // m * m


def _pad_to(arr, target_shape):
    pads = [(0, t - s) for s, t in zip(arr.shape, target_shape)]
    if all(p == (0, 0) for p in pads):
        return arr
    return jnp.pad(arr, pads)


def _largest_aligned_divisor(dim, cap, align=128):
    """Largest d <= cap with d % align == 0 and dim % d == 0.
    `dim` must be a multiple of `align`; returns dim itself when dim <= cap."""
    if dim <= cap:
        return dim
    best = align
    d = align
    while d <= cap:
        if dim % d == 0:
            best = d
        d += align
    return best


def _vmem_budget_bytes():
    """Generation-aware scoped-VMEM budget (~48 MiB on v7x, ~96 MiB v5e/v6e)."""
    try:
        physical = int(pltpu.get_tpu_info().vmem_capacity_bytes)
    except Exception:
        physical = 64 * 1024 * 1024  # conservative (v7x-sized) fallback
    return min(physical * 3 // 4, 100 * 1024 * 1024)


def _select_tiles(M, Kp, Np, x_itemsize, w_itemsize, o_itemsize, budget_bytes):
    """Pick (tm, tn, tk) — big tiles, shrunk to fit the VMEM budget."""
    cap_tk = 2048 if max(x_itemsize, w_itemsize) <= 2 else 1024
    tm = min(512, _round_up(M, 8))
    tn = _largest_aligned_divisor(Np, 512)
    tk = _largest_aligned_divisor(Kp, cap_tk)

    def working_set(tm_, tn_, tk_):
        w_bufs = 3 if tm_ <= 64 else 2  # skinny-M uses a 3-deep weight pipeline
        ws = (2 * tm_ * tk_ * x_itemsize
              + w_bufs * tk_ * tn_ * w_itemsize
              + 2 * tm_ * tn_ * o_itemsize
              + 2 * Np * 4)
        if o_itemsize != 4:             # f32 accumulator scratch (low-prec out)
            ws += tm_ * tn_ * 4
        return ws

    limit = max(budget_bytes - (4 << 20), 8 << 20)  # headroom for compiler scratch
    while working_set(tm, tn, tk) > limit:
        if tk > 128:
            tk = _largest_aligned_divisor(Kp, tk // 2)
        elif tn > 128:
            tn = _largest_aligned_divisor(Np, tn // 2)
        elif tm > 8:
            tm = _round_up(max(8, tm // 2), 8)
        else:
            break

    # v7x has 2 TensorCores: ensure >= 2 "parallel" grid blocks when possible.
    Mp = _round_up(M, tm)
    if (Mp // tm) * (Np // tn) == 1:
        if tn % 256 == 0:
            tn //= 2
        elif tm % 16 == 0:
            tm //= 2
    return tm, tn, tk


# -------------------------------- kernels ----------------------------------


def _linear_kernel_f32out(x_ref, wt_ref, b_ref, o_ref):
    """f32 output: accumulate directly into the VMEM-resident output block."""
    k = pl.program_id(2)
    partial = jnp.dot(x_ref[...], wt_ref[...], preferred_element_type=jnp.float32)

    @pl.when(k == 0)
    def _():
        o_ref[...] = partial + b_ref[...]

    @pl.when(k > 0)
    def _():
        o_ref[...] += partial


def _linear_kernel_accout(x_ref, wt_ref, b_ref, o_ref, acc_ref):
    """Low-precision output: f32 scratch accumulator, single store in epilogue."""
    k = pl.program_id(2)
    partial = jnp.dot(x_ref[...], wt_ref[...], preferred_element_type=jnp.float32)

    @pl.when(k == 0)
    def _():
        acc_ref[...] = partial

    @pl.when(k > 0)
    def _():
        acc_ref[...] += partial

    @pl.when(k == pl.num_programs(2) - 1)
    def _():
        o_ref[...] = (acc_ref[...] + b_ref[...].astype(jnp.float32)).astype(o_ref.dtype)


# ------------------------------- forward -----------------------------------


def linear_forward(x, w_kn, b=None, *, out_features=None, tm=None, tn=None, tk=None):
    """x: (M, K); w_kn: (Kp, Np) pre-transposed (and ideally pre-padded) weight;
    b: (1, Np) f32 bias or None.  Returns (M, out_features)."""
    M, K = x.shape
    Kp, Np = w_kn.shape
    assert K <= Kp, "x feature dim larger than (padded) weight"
    if out_features is None:
        out_features = Np

    out_dtype = x.dtype
    o_itemsize = jnp.dtype(out_dtype).itemsize

    if b is None:
        bp = jnp.zeros((1, Np), jnp.float32)
    else:
        bp = _pad_to(b.reshape(1, -1).astype(jnp.float32), (1, Np))  # no-op if pre-padded

    budget = _vmem_budget_bytes()
    if tm is None or tn is None or tk is None:
        tm_a, tn_a, tk_a = _select_tiles(
            M, Kp, Np,
            jnp.dtype(x.dtype).itemsize, jnp.dtype(w_kn.dtype).itemsize,
            o_itemsize, budget)
        tm = tm or tm_a
        tn = tn or tn_a
        tk = tk or tk_a

    Mp = _round_up(M, tm)
    xp = _pad_to(x, (Mp, Kp))  # only the activation is padded per call (tiny)

    grid = (Mp // tm, Np // tn, Kp // tk)
    k_steps = grid[2]

    # Skinny-M regime: deeper weight pipeline hides per-step DMA issue latency.
    if tm <= 64 and k_steps > 2:
        w_spec = pl.BlockSpec((tk, tn), lambda i, j, k: (k, j),
                              pipeline_mode=pl.Buffered(3))
    else:
        w_spec = pl.BlockSpec((tk, tn), lambda i, j, k: (k, j))

    in_specs = [
        pl.BlockSpec((tm, tk), lambda i, j, k: (i, k)),
        w_spec,
        pl.BlockSpec((1, tn), lambda i, j, k: (0, j)),
    ]
    out_spec = pl.BlockSpec((tm, tn), lambda i, j, k: (i, j))

    if jnp.dtype(out_dtype) == jnp.dtype(jnp.float32):
        kernel = _linear_kernel_f32out
        scratch = ()
    else:
        kernel = _linear_kernel_accout
        scratch = (pltpu.VMEM((tm, tn), jnp.float32),)

    out_padded = pl.pallas_call(
        kernel,
        out_shape=jax.ShapeDtypeStruct((Mp, Np), out_dtype),
        grid_spec=pltpu.PrefetchScalarGridSpec(
            num_scalar_prefetch=0,
            grid=grid,
            in_specs=in_specs,
            out_specs=out_spec,
            scratch_shapes=scratch,
        ),
        compiler_params=pltpu.CompilerParams(
            dimension_semantics=("parallel", "parallel", "arbitrary"),
            vmem_limit_bytes=int(budget),
        ),
    )(xp, w_kn, bp)

    if (Mp, Np) == (M, out_features):
        return out_padded
    return out_padded[:M, :out_features]


# --------------------------------- init ------------------------------------


def init_linear_params(key, input_size, output_size, bias=True,
                       param_dtype=jnp.float32):
    """Matches torch.nn.Linear + kaiming_normal_ (fan_in=input_size, gain=sqrt(2))
    and zero bias.  The weight is returned pre-transposed to (K, N) and
    pre-padded to 128-multiples so the forward path never pads or transposes
    in HBM.  Set param_dtype=jnp.bfloat16 to store operands bf16 (f32 accum)."""
    std = (2.0 / input_size) ** 0.5
    w = jax.random.normal(key, (input_size, output_size), jnp.float32) * std
    Kp = _round_up(input_size, 128)
    Np = _round_up(output_size, 128)
    w_kn = _pad_to(w, (Kp, Np)).astype(param_dtype)
    b = jnp.zeros((1, Np), jnp.float32) if bias else None  # bias stays f32
    return w_kn, b


# --------------------------------- demo -------------------------------------


if __name__ == "__main__":
    batch = 8
    input_size = 32
    output_size = 16

    key = jax.random.PRNGKey(0)
    kx, kw = jax.random.split(key)

    x = jax.random.normal(kx, (batch, input_size), jnp.float32)
    w_kn, bias = init_linear_params(kw, input_size, output_size, bias=True)

    fwd = jax.jit(linear_forward, static_argnames=("out_features", "tm", "tn", "tk"))

    # f32 path (matches the PyTorch module exactly)
    out = jax.block_until_ready(fwd(x, w_kn, bias, out_features=output_size))
    ref = x @ w_kn[:input_size, :output_size] + bias[:, :output_size]
    assert out.shape == (batch, output_size)
    assert jnp.allclose(out, ref, atol=1e-5, rtol=1e-5)

    # bf16 operand path (f32 accumulation + f32 bias epilogue), loose tolerance
    w_bf16, b_bf16 = init_linear_params(kw, input_size, output_size, bias=True,
                                        param_dtype=jnp.bfloat16)
    out_bf16 = jax.block_until_ready(
        fwd(x.astype(jnp.bfloat16), w_bf16, b_bf16, out_features=output_size))
    assert out_bf16.shape == (batch, output_size)
    assert jnp.allclose(out_bf16.astype(jnp.float32), ref, atol=1e-1, rtol=1e-1)

    print("KERNEL_OK")
</pallas_src>

<mosaic_0001>
module attributes {stable_mosaic.version = 11 : i64} {
  func.func @_linear_kernel_f32out(%arg0: i32, %arg1: i32, %arg2: i32, %arg3: memref<8x128xf32, #tpu.memory_space<vmem>>, %arg4: memref<128x128xf32, #tpu.memory_space<vmem>>, %arg5: memref<1x128xf32, #tpu.memory_space<vmem>>, %arg6: memref<8x128xf32, #tpu.memory_space<vmem>>) attributes {dimension_semantics = [#tpu.dimension_semantics<parallel>, #tpu.dimension_semantics<parallel>, #tpu.dimension_semantics<arbitrary>], iteration_bounds = array<i64: 1, 1, 1>, scalar_prefetch = 0 : i64, scratch_operands = 0 : i64, tpu.core_type = #tpu.core_type<tc>, window_params = [{transform_indices = @transform_0, window_bounds = array<i64: 8, 128>}, {transform_indices = @transform_1, window_bounds = array<i64: 128, 128>}, {transform_indices = @transform_2, window_bounds = array<i64: 1, 128>}, {transform_indices = @transform_3, window_bounds = array<i64: 8, 128>}]} {
    %c0 = arith.constant 0 : index
    %c0_0 = arith.constant 0 : index
    %0 = vector.load %arg3[%c0, %c0_0] : memref<8x128xf32, #tpu.memory_space<vmem>>, vector<8x128xf32>
    %c0_1 = arith.constant 0 : index
    %c0_2 = arith.constant 0 : index
    %1 = vector.load %arg4[%c0_1, %c0_2] : memref<128x128xf32, #tpu.memory_space<vmem>>, vector<128x128xf32>
    %cst = arith.constant dense<0.000000e+00> : vector<8x128xf32>
    %2 = tpu.matmul %0, %1, %cst {dimension_numbers = #tpu.dot_dimension_numbers<[1], [0], [0], [1], [0, 0, 1, 1], [], []>} : vector<8x128xf32>, vector<128x128xf32>, vector<8x128xf32> -> vector<8x128xf32>
    %c0_i32 = arith.constant 0 : i32
    %3 = arith.cmpi eq, %arg2, %c0_i32 : i32
    %4 = arith.extui %3 : i1 to i32
    %c0_i32_3 = arith.constant 0 : i32
    %5 = arith.cmpi ne, %4, %c0_i32_3 : i32
    scf.if %5 {
      %c0_6 = arith.constant 0 : index
      %c0_7 = arith.constant 0 : index
      %9 = vector.load %arg5[%c0_6, %c0_7] : memref<1x128xf32, #tpu.memory_space<vmem>>, vector<1x128xf32>
      %10 = vector.broadcast %9 : vector<1x128xf32> to vector<8x128xf32>
      %11 = arith.addf %2, %10 : vector<8x128xf32>
      %c0_8 = arith.constant 0 : index
      %c0_9 = arith.constant 0 : index
      %12 = vector.load %arg6[%c0_8, %c0_9] : memref<8x128xf32, #tpu.memory_space<vmem>>, vector<8x128xf32>
      tpu.vector_store %arg6[%c0_8, %c0_9], %11 {strides = array<i32>} : memref<8x128xf32, #tpu.memory_space<vmem>>, vector<8x128xf32>,
    } else {
    }
    %c0_i32_4 = arith.constant 0 : i32
    %6 = arith.cmpi sgt, %arg2, %c0_i32_4 : i32
    %7 = arith.extui %6 : i1 to i32
    %c0_i32_5 = arith.constant 0 : i32
    %8 = arith.cmpi ne, %7, %c0_i32_5 : i32
    scf.if %8 {
      %c0_6 = arith.constant 0 : index
      %c0_7 = arith.constant 0 : index
      %9 = vector.load %arg6[%c0_6, %c0_7] : memref<8x128xf32, #tpu.memory_space<vmem>>, vector<8x128xf32>
      %10 = arith.addf %9, %2 : vector<8x128xf32>
      %c0_8 = arith.constant 0 : index
      %c0_9 = arith.constant 0 : index
      %11 = vector.load %arg6[%c0_8, %c0_9] : memref<8x128xf32, #tpu.memory_space<vmem>>, vector<8x128xf32>
      tpu.vector_store %arg6[%c0_8, %c0_9], %10 {strides = array<i32>} : memref<8x128xf32, #tpu.memory_space<vmem>>, vector<8x128xf32>,
    } else {
    }
    return
  }
  func.func @transform_0(%arg0: i32, %arg1: i32, %arg2: i32) -> (i32, i32) {
    %c0_i32 = arith.constant 0 : i32
    return %arg0, %arg2 : i32, i32
  }
  func.func @transform_1(%arg0: i32, %arg1: i32, %arg2: i32) -> (i32, i32) {
    %c0_i32 = arith.constant 0 : i32
    return %arg2, %arg1 : i32, i32
  }
  func.func @transform_2(%arg0: i32, %arg1: i32, %arg2: i32) -> (i32, i32) {
    %c0_i32 = arith.constant 0 : i32
    %c0_i32_0 = arith.constant 0 : i32
    return %c0_i32, %arg1 : i32, i32
  }
  func.func @transform_3(%arg0: i32, %arg1: i32, %arg2: i32) -> (i32, i32) {
    %c0_i32 = arith.constant 0 : i32
    return %arg0, %arg1 : i32, i32
  }
}

</mosaic_0001>

<llo_original>
// kernel: linear_forward.1
$region0: #{linear_forward.1}
  #allocation0 [shape = 'u32[]', space=smem, size = 0x4, offset = 0x4, fixed_abs, tag = 'smem constant byte address 0x4 - core index']
  #allocation1 [shape = 'u32[144,128]{1,0:T(1,128)}', space=vmem, size = 0x12000, scoped, tag = 'internal scratch']
  %s0 = inlined_call_operand.vmem [shape: f32[8,128], index: 0, kind: input, shape index: {}]
  %s1 = inlined_call_operand.hbm [shape: f32[128,128], index: 1, kind: input, shape index: {}]
  %s2 = inlined_call_operand.vmem [shape: f32[1,128], index: 2, kind: input, shape index: {}]
  %s3 = inlined_call_operand.hbm [shape: f32[8,128], index: 3, kind: output, shape index: {}]
  %s4 = sld [smem:[#allocation0]]
  $region34: #{linear_forward.1} parent=0
    _
  %s6 = ssub.s32 1, %s4
  %s7 = scalar_select 0, %s6, %s4
  $region1: #{linear_forward.1} parent=0
    #allocation2 [shape = 'u8[65536]{0}', space=vmem, size = 0x10000, scoped, tag = 'input window, operand 1, single buffered']
    #allocation3 [shape = 's32[1]{0}', space=sflag, size = 0x4, scoped, tag = 'scoped memory for linear_forward.1']
    #allocation4 [shape = 's32[1]{0}', space=sflag, size = 0x4, scoped, tag = 'scoped memory for linear_forward.1']
    #allocation5 [shape = 'u8[4096]{0}', space=vmem, size = 0x1000, scoped, tag = 'output window, operand 0, single buffered']
    %8 = vsyncpa [#allocation3], 0
    %9 = vsyncpa [#allocation4], 0
    // Predicated region
    $region2: #{linear_forward.1} parent=1 // pred_check
      _
    $region3: #{linear_forward.1} parent=1 // pred_check_branch
      %11 = sbr.rel (0) target = $region5
    $region4: #{linear_forward.1} parent=1 // pred_region
      _
    $region5: #{linear_forward.1} parent=1 // pred_fallthru
      _
    // Predicated region
    $region6: #{linear_forward.1} parent=1 // pred_check
      _
    $region7: #{linear_forward.1} parent=1 // pred_check_branch
      %13 = sbr.rel (0) target = $region9
    $region8: #{linear_forward.1} parent=1 // pred_region
      %s15 = ssub.s32 2048, 2048
      %16 = vsyncadd [#allocation3], %s15
      %s17 = sshll.u32 [#allocation2], 4
      %s18 = int_to_ptr.vmem [resolvable:$true] %s17
      %23 = dma.hbm_to_vmem [thread:$0]  %s1, 2048, %s18, [#allocation3], 128, 128, 8
    $region9: #{linear_forward.1} parent=1 // pred_fallthru
      _
    // Predicated region
    $region10: #{linear_forward.1} parent=1 // pred_check
      _
    $region11: #{linear_forward.1} parent=1 // pred_check_branch
      %25 = sbr.rel (0) target = $region13
    $region12: #{linear_forward.1} parent=1 // pred_region
      _
    $region13: #{linear_forward.1} parent=1 // pred_fallthru
      _
    // Predicated region
    $region14: #{linear_forward.1} parent=1 // pred_check
      _
    $region15: #{linear_forward.1} parent=1 // pred_check_branch
      %27 = sbr.rel (0) target = $region17
    $region16: #{linear_forward.1} parent=1 // pred_region
      %28 = dma.done [#allocation3], 2048
    $region17: #{linear_forward.1} parent=1 // pred_fallthru
      _
    %v29 = vld [vmem:[%s0] sm:$0xff]
    %v30 = vld [vmem:[#allocation2] sm:$0xff]
    %v31 = vld [vmem:[#allocation2 + $0x8] sm:$0xff]
    %v32 = vld [vmem:[#allocation2 + $0x10] sm:$0xff]
    %v33 = vld [vmem:[#allocation2 + $0x18] sm:$0xff]
    %v34 = vld [vmem:[#allocation2 + $0x20] sm:$0xff]
    %v35 = vld [vmem:[#allocation2 + $0x28] sm:$0xff]
    %v36 = vld [vmem:[#allocation2 + $0x30] sm:$0xff]
    %v37 = vld [vmem:[#allocation2 + $0x38] sm:$0xff]
    %v38 = vld [vmem:[#allocation2 + $0x40] sm:$0xff]
    %v39 = vld [vmem:[#allocation2 + $0x48] sm:$0xff]
    %v40 = vld [vmem:[#allocation2 + $0x50] sm:$0xff]
    %v41 = vld [vmem:[#allocation2 + $0x58] sm:$0xff]
    %v42 = vld [vmem:[#allocation2 + $0x60] sm:$0xff]
    %v43 = vld [vmem:[#allocation2 + $0x68] sm:$0xff]
    %v44 = vld [vmem:[#allocation2 + $0x70] sm:$0xff]
    %v45 = vld [vmem:[#allocation2 + $0x78] sm:$0xff]
    %46 = vmatprep.subr.mxu0 0.0
    %47 = vmatpush1.msra.mxu0 %v30
    %48 = vmatprep.subr.mxu0 0.0
    %49 = vmatpush1.msra.mxu0 %v31
    %50 = vmatprep.subr.mxu0 0.0
    %51 = vmatpush1.msra.mxu0 %v32
    %52 = vmatprep.subr.mxu0 0.0
    %53 = vmatpush1.msra.mxu0 %v33
    %54 = vmatprep.subr.mxu0 0.0
    %55 = vmatpush1.msra.mxu0 %v34
    %56 = vmatprep.subr.mxu0 0.0
    %57 = vmatpush1.msra.mxu0 %v35
    %58 = vmatprep.subr.mxu0 0.0
    %59 = vmatpush1.msra.mxu0 %v36
    %60 = vmatprep.subr.mxu0 0.0
    %61 = vmatpush1.msra.mxu0 %v37
    %62 = vmatprep.subr.mxu0 0.0
    %63 = vmatpush1.msra.mxu0 %v38
    %64 = vmatprep.subr.mxu0 0.0
    %65 = vmatpush1.msra.mxu0 %v39
    %66 = vmatprep.subr.mxu0 0.0
    %67 = vmatpush1.msra.mxu0 %v40
    %68 = vmatprep.subr.mxu0 0.0
    %69 = vmatpush1.msra.mxu0 %v41
    %70 = vmatprep.subr.mxu0 0.0
    %71 = vmatpush1.msra.mxu0 %v42
    %72 = vmatprep.subr.mxu0 0.0
    %73 = vmatpush1.msra.mxu0 %v43
    %74 = vmatprep.subr.mxu0 0.0
    %75 = vmatpush1.msra.mxu0 %v44
    %76 = vmatprep.subr.mxu0 0.0
    %77 = vmatpush1.msra.mxu0 %v45
    %78 = vmatprep.subr.mxu0 0.0
    %79 = vmatpush1.msra.mxu0 0.0
    %80 = vmatprep.subr.mxu0 0.0
    %81 = vmatpush1.msra.mxu0 0.0
    %82 = vmatprep.subr.mxu0 0.0
    %83 = vmatpush1.msra.mxu0 0.0
    %84 = vmatprep.subr.mxu0 0.0
    %85 = vmatpush1.msra.mxu0 0.0
    %86 = vmatprep.subr.mxu0 0.0
    %87 = vmatpush1.msra.mxu0 0.0
    %88 = vmatprep.subr.mxu0 0.0
    %89 = vmatpush1.msra.mxu0 0.0
    %90 = vmatprep.subr.mxu0 0.0
    %91 = vmatpush1.msra.mxu0 0.0
    %92 = vmatprep.subr.mxu0 0.0
    %93 = vmatpush1.msra.mxu0 0.0
    %94 = vmatprep.subr.mxu0 0.0
    %95 = vmatpush1.msra.mxu0 0.0
    %96 = vmatprep.subr.mxu0 0.0
    %97 = vmatpush1.msra.mxu0 0.0
    %98 = vmatprep.subr.mxu0 0.0
    %99 = vmatpush1.msra.mxu0 0.0
    %100 = vmatprep.subr.mxu0 0.0
    %101 = vmatpush1.msra.mxu0 0.0
    %102 = vmatprep.subr.mxu0 0.0
    %103 = vmatpush1.msra.mxu0 0.0
    %104 = vmatprep.subr.mxu0 0.0
    %105 = vmatpush1.msra.mxu0 0.0
    %106 = vmatprep.subr.mxu0 0.0
    %107 = vmatpush1.msra.mxu0 0.0
    %108 = vmatprep.subr.mxu0 0.0
    %109 = vmatpush1.msra.mxu0 0.0
    %110 = vmatprep.mubr.f32.mxu0 0.0
    %111 = vmatmul.mubr.f32.gmra.mrb[0].mxu0 %v29
    %v112 = vpop.f32.mrb[0].mxu0
    %v113 = vadd.f32 0.0, %v112
    %v114 = vpop.f32.mrb[0].mxu0
    %115 = vdwg.mxu0
    %p116 = scmp.eq.s32.totalorder 0, 0
    // Predicated region
    $region18: #{linear_forward.1} parent=1 // pred_check
      %p117 = pneg %p116
    $region19: #{linear_forward.1} parent=1 // pred_check_branch
      %119 = sbr.rel (%p117) target = $region21
    $region20: #{linear_forward.1} parent=1 // pred_region
      %v120 = vld [vmem:[%s2] sm:$0x1]
      %v122 = vlaneseq
      %v123 = vshrl.u32 %v122, 7
      %v124 = vsub.s32 0, %v123
      %v125 = vrot.slane %v120, %v124
      %v127 = vadd.f32 %v113, %v125
      %128 = vst [vmem:[#allocation5] sm:$0xff] %v127
    $region21: #{linear_forward.1} parent=1 // pred_fallthru
      _
    %p129 = scmp.gt.s32.totalorder 0, 0
    // Predicated region
    $region22: #{linear_forward.1} parent=1 // pred_check
      %p130 = pneg %p129
    $region23: #{linear_forward.1} parent=1 // pred_check_branch
      %132 = sbr.rel (%p130) target = $region25
    $region24: #{linear_forward.1} parent=1 // pred_region
      %v133 = vld [vmem:[#allocation5] sm:$0xff]
      %v134 = vadd.f32 %v133, %v113
      %135 = vst [vmem:[#allocation5] sm:$0xff] %v134
    $region25: #{linear_forward.1} parent=1 // pred_fallthru
      _
    // Predicated region
    $region26: #{linear_forward.1} parent=1 // pred_check
      _
    $region27: #{linear_forward.1} parent=1 // pred_check_branch
      %137 = sbr.rel (0) target = $region29
    $region28: #{linear_forward.1} parent=1 // pred_region
      %s139 = ssub.s32 128, 128
      %140 = vsyncadd [#allocation4], %s139
      %s142 = sshll.u32 [#allocation5], 4
      %s143 = int_to_ptr.vmem [resolvable:$true] %s142
      %145 = dma.vmem_to_hbm [thread:$0]  %s143, 128, %s3, [#allocation4]
    $region29: #{linear_forward.1} parent=1 // pred_fallthru
      _
    // Predicated region
    $region30: #{linear_forward.1} parent=1 // pred_check
      _
    $region31: #{linear_forward.1} parent=1 // pred_check_branch
      %147 = sbr.rel (0) target = $region33
    $region32: #{linear_forward.1} parent=1 // pred_region
      %148 = dma.done [#allocation4], 128
    $region33: #{linear_forward.1} parent=1 // pred_fallthru
      _
    %149 = vsyncpa [#allocation3], 1
    %150 = vsyncpa [#allocation4], 1

</llo_original>
